<compile_context>
chip_gen: v6e
topology: v6e:2x2x1
jax: 0.10.0
libtpu: 0.0.40
codegen_flags: <defaults>
</compile_context>

<pallas_src>
import math

import jax
import jax.numpy as jnp
from jax.experimental import pallas as pl
from jax.experimental.pallas import tpu as pltpu


def _acos(x):
    """acos(x), x in [-1, 1], Abramowitz & Stegun 4.4.46 (max err ~2e-8).

    Pure VPU (mul/add/select) + one EUP sqrt; no Newton, no sin/cos, no divide.
    """
    a = jnp.abs(x)
    p = jnp.float32(-0.0012624911)
    for c in (0.0066700901, -0.0170881256, 0.0308918810, -0.0501743046,
              0.0889789874, -0.2145988016, 1.5707963050):
        p = p * a + jnp.float32(c)
    r = jnp.sqrt(jnp.maximum(1.0 - a, 0.0)) * p
    return jnp.where(x < 0.0, jnp.float32(math.pi) - r, r)


def _logquat_loss_kernel(qhat_ref, q_ref, params_ref, out_ref, acc_ref):
    """One (8, TB) lane-dense batch tile; accumulates per-row L1 partial sums.

    Row layout (batch on the 128-wide lane axis):
      q:     rows 0-2 = t, rows 3-5 = v, row 6 = u, row 7 = pad(0)
      q_hat: rows 0-2 = t_hat, rows 3-5 = log_q_hat, rows 6-7 = pad(0)
    """
    step = pl.program_id(0)

    @pl.when(step == 0)
    def _init():
        acc_ref[...] = jnp.zeros_like(acc_ref)

    # unity_quaternion_to_logq scale = acos(clip(u)) / max(||v||, 1e-8),
    # fused as ang * rsqrt(max(||v||^2, 1e-16)) -> single EUP op for the norm.
    vx = q_ref[3:4, :]
    vy = q_ref[4:5, :]
    vz = q_ref[5:6, :]
    u = q_ref[6:7, :]
    ss = vx * vx + vy * vy + vz * vz                      # (1, TB)
    ang = _acos(jnp.clip(u, -1.0, 1.0))                   # (1, TB)
    scale = ang * jax.lax.rsqrt(jnp.maximum(ss, 1e-16))   # (1, TB)

    # Per-row multiplier: rows 0-2 -> 1 (translation passthrough),
    # rows 3-5 -> scale (v * scale = log_q), rows 6-7 -> 0 (mask pad rows).
    row = jax.lax.broadcasted_iota(jnp.int32, (8, 1), 0)
    scale_full = jnp.where(row < 3, jnp.ones_like(scale),
                           jnp.where(row < 6, scale, jnp.zeros_like(scale)))

    # Single dense (8, TB) diff/abs pass; zero-padded batch columns contribute
    # exactly 0 (q/q_hat pad columns are zero, so v * scale = 0 there).
    diff = jnp.abs(qhat_ref[...] - q_ref[...] * scale_full)        # (8, TB)
    acc_ref[...] += jnp.sum(diff, axis=1, keepdims=True)           # (8, 1)

    @pl.when(step == pl.num_programs(0) - 1)
    def _finalize():
        beta = jnp.full((1, 1), params_ref[0], dtype=jnp.float32)
        gamma = jnp.full((1, 1), params_ref[1], dtype=jnp.float32)
        inv_count = jnp.full((1, 1), params_ref[2], dtype=jnp.float32)
        w_t = inv_count * jnp.exp(-beta)     # mean + exp(-beta) weighting
        w_r = inv_count * jnp.exp(-gamma)    # mean + exp(-gamma) weighting
        w = jnp.where(row < 3, w_t, jnp.where(row < 6, w_r, jnp.zeros_like(w_t)))
        out_ref[...] = (jnp.sum(acc_ref[...] * w, axis=0, keepdims=True)
                        + beta + gamma)


def _round_up(x, m):
    return (x + m - 1) // m * m


def log_quat_loss(q_hat, q, beta, gamma, *, block_b=65536):
    """q_hat: [B, 6], q: [B, 7], beta/gamma: scalar-like f32 -> scalar loss."""
    q = q.astype(jnp.float32)
    q_hat = q_hat.astype(jnp.float32)
    B = q.shape[0]
    assert q.shape == (B, 7) and q_hat.shape == (B, 6)

    # Lane tile: multiple of 128, large enough that typical B fits one step.
    # Capped at 65536 so 2 inputs x 2 buffers x (8 x tb) f32 = 8 MiB max,
    # safe under v5e's 16 MiB scoped default and v7x's 64 MiB physical VMEM.
    tb = min(block_b, _round_up(B, 128))
    bp = _round_up(B, tb)
    nb = bp // tb

    # Layout plumbing only (outside the kernel): component-major, batch on
    # lanes, components padded 7->8 / 6->8, batch zero-padded to bp.
    # TODO(synk): remove by having the producer emit [C, B] directly.
    q_t = jnp.pad(q.T, ((0, 1), (0, bp - B)))          # (8, bp)
    qh_t = jnp.pad(q_hat.T, ((0, 2), (0, bp - B)))     # (8, bp)

    # beta, gamma, 1/(3B) in one SMEM vector (no tiny VMEM DMAs, no recompile
    # when only the true batch size changes under the same padded shape).
    params = jnp.stack([
        jnp.reshape(beta, ()).astype(jnp.float32),
        jnp.reshape(gamma, ()).astype(jnp.float32),
        jnp.asarray(1.0 / (3.0 * B), dtype=jnp.float32),
    ])                                                  # (3,)

    block_bytes = 8 * tb * 4
    vmem_limit = max(16 * 1024 * 1024, 4 * block_bytes + (4 << 20))

    out = pl.pallas_call(
        _logquat_loss_kernel,
        out_shape=jax.ShapeDtypeStruct((1, 1), jnp.float32),
        grid_spec=pltpu.PrefetchScalarGridSpec(
            num_scalar_prefetch=0,
            grid=(nb,),
            in_specs=[
                pl.BlockSpec((8, tb), lambda i: (0, i)),                 # q_hat
                pl.BlockSpec((8, tb), lambda i: (0, i)),                 # q
                pl.BlockSpec(memory_space=pltpu.MemorySpace.SMEM),       # params
            ],
            out_specs=pl.BlockSpec((1, 1), lambda i: (0, 0)),
            scratch_shapes=[pltpu.VMEM((8, 1), jnp.float32)],  # per-row L1 sums
        ),
        compiler_params=pltpu.CompilerParams(
            dimension_semantics=("arbitrary",),
            vmem_limit_bytes=int(vmem_limit)),
    )(qh_t, q_t, params)
    return out[0, 0]


def _ref_loss(q_hat, q, beta, gamma):
    """Pure-JAX reference mirroring the PyTorch module."""
    t = q[:, :3]
    quat = q[:, 3:]
    u = quat[:, -1]
    v = quat[:, :-1]
    norm = jnp.maximum(jnp.linalg.norm(v, axis=1, keepdims=True), 1e-8)
    log_q = v * (jnp.arccos(jnp.clip(u, -1.0, 1.0)).reshape(-1, 1) / norm)
    t_hat = q_hat[:, :3]
    log_q_hat = q_hat[:, 3:]
    b = jnp.reshape(beta, ())
    g = jnp.reshape(gamma, ())
    return (jnp.mean(jnp.abs(t_hat - t)) * jnp.exp(-b) + b
            + jnp.mean(jnp.abs(log_q_hat - log_q)) * jnp.exp(-g) + g)


def _make_inputs(key, batch):
    k1, k2, k3 = jax.random.split(key, 3)
    trans = jax.random.normal(k1, (batch, 3), dtype=jnp.float32)
    quat = jax.random.normal(k2, (batch, 4), dtype=jnp.float32)
    quat = quat / jnp.linalg.norm(quat, axis=1, keepdims=True)
    q = jnp.concatenate([trans, quat], axis=1)           # [B, 7]
    q_hat = jax.random.normal(k3, (batch, 6), dtype=jnp.float32)
    return q_hat, q


if __name__ == "__main__":
    key = jax.random.PRNGKey(0)
    kA, kB = jax.random.split(key, 2)

    # Parameters as in __init__: gamma = -3, beta = 0.
    gamma = jnp.array([-3.0], dtype=jnp.float32)
    beta = jnp.array([0.0], dtype=jnp.float32)

    # Small shape consistent with the module (single-step grid, nb == 1).
    q_hat, q = _make_inputs(kA, 8)
    loss = jax.block_until_ready(log_quat_loss(q_hat, q, beta, gamma))
    ref = jax.block_until_ready(_ref_loss(q_hat, q, beta, gamma))
    assert jnp.isfinite(loss), "non-finite loss"
    tol = 1e-3 * max(1.0, abs(float(ref)))
    assert abs(float(loss) - float(ref)) < tol, (float(loss), float(ref))

    # Exercise the multi-step accumulator path (nb > 1) with a forced small tile.
    q_hat2, q2 = _make_inputs(kB, 300)
    loss2 = jax.block_until_ready(
        log_quat_loss(q_hat2, q2, beta, gamma, block_b=128))
    ref2 = jax.block_until_ready(_ref_loss(q_hat2, q2, beta, gamma))
    tol2 = 1e-3 * max(1.0, abs(float(ref2)))
    assert abs(float(loss2) - float(ref2)) < tol2, (float(loss2), float(ref2))

    print("KERNEL_OK")
</pallas_src>

<mosaic_0001>
module attributes {stable_mosaic.version = 11 : i64} {
  func.func @_logquat_loss_kernel(%arg0: i32, %arg1: memref<8x128xf32, #tpu.memory_space<vmem>>, %arg2: memref<8x128xf32, #tpu.memory_space<vmem>>, %arg3: memref<3xf32, #tpu.memory_space<smem>>, %arg4: memref<1x1xf32, #tpu.memory_space<vmem>>, %arg5: memref<8x1xf32, #tpu.memory_space<vmem>>) attributes {dimension_semantics = [#tpu.dimension_semantics<arbitrary>], iteration_bounds = array<i64: 1>, scalar_prefetch = 0 : i64, scratch_operands = 1 : i64, tpu.core_type = #tpu.core_type<tc>, window_params = [{transform_indices = @transform_0, window_bounds = array<i64: 8, 128>}, {transform_indices = @transform_1, window_bounds = array<i64: 8, 128>}, {transform_indices = @transform_2, window_bounds = array<i64: 3>}, {pipeline_mode = #tpu.pipeline_mode<synchronous>, transform_indices = @transform_3, window_bounds = array<i64: 1, 1>}]} {
    %c0_i32 = arith.constant 0 : i32
    %0 = arith.cmpi eq, %arg0, %c0_i32 : i32
    %1 = arith.extui %0 : i1 to i32
    %c0_i32_0 = arith.constant 0 : i32
    %2 = arith.cmpi ne, %1, %c0_i32_0 : i32
    scf.if %2 {
      %cst_31 = arith.constant 0.000000e+00 : f32
      %86 = vector.broadcast %cst_31 : f32 to vector<8x1xf32>
      %c0_32 = arith.constant 0 : index
      %c0_33 = arith.constant 0 : index
      %87 = vector.load %arg5[%c0_32, %c0_33] : memref<8x1xf32, #tpu.memory_space<vmem>>, vector<8x1xf32>
      tpu.vector_store %arg5[%c0_32, %c0_33], %86 {strides = array<i32>} : memref<8x1xf32, #tpu.memory_space<vmem>>, vector<8x1xf32>,
    } else {
    }
    %c3 = arith.constant 3 : index
    %c0 = arith.constant 0 : index
    %3 = vector.load %arg2[%c3, %c0] : memref<8x128xf32, #tpu.memory_space<vmem>>, vector<1x128xf32>
    %c4 = arith.constant 4 : index
    %c0_1 = arith.constant 0 : index
    %4 = vector.load %arg2[%c4, %c0_1] : memref<8x128xf32, #tpu.memory_space<vmem>>, vector<1x128xf32>
    %c5 = arith.constant 5 : index
    %c0_2 = arith.constant 0 : index
    %5 = vector.load %arg2[%c5, %c0_2] : memref<8x128xf32, #tpu.memory_space<vmem>>, vector<1x128xf32>
    %c6 = arith.constant 6 : index
    %c0_3 = arith.constant 0 : index
    %6 = vector.load %arg2[%c6, %c0_3] : memref<8x128xf32, #tpu.memory_space<vmem>>, vector<1x128xf32>
    %7 = arith.mulf %3, %3 : vector<1x128xf32>
    %8 = arith.mulf %4, %4 : vector<1x128xf32>
    %9 = arith.addf %7, %8 : vector<1x128xf32>
    %10 = arith.mulf %5, %5 : vector<1x128xf32>
    %11 = arith.addf %9, %10 : vector<1x128xf32>
    %cst = arith.constant -1.000000e+00 : f32
    %cst_4 = arith.constant 1.000000e+00 : f32
    %12 = vector.broadcast %cst : f32 to vector<1x128xf32>
    %13 = arith.maximumf %12, %6 : vector<1x128xf32>
    %14 = vector.broadcast %cst_4 : f32 to vector<1x128xf32>
    %15 = arith.minimumf %14, %13 : vector<1x128xf32>
    %16 = math.absf %15 : vector<1x128xf32>
    %cst_5 = arith.constant -0.0012624911 : f32
    %17 = vector.broadcast %cst_5 : f32 to vector<1x128xf32>
    %18 = arith.mulf %17, %16 : vector<1x128xf32>
    %cst_6 = arith.constant 6.670090e-03 : f32
    %19 = vector.broadcast %cst_6 : f32 to vector<1x128xf32>
    %20 = arith.addf %18, %19 : vector<1x128xf32>
    %21 = arith.mulf %20, %16 : vector<1x128xf32>
    %cst_7 = arith.constant -0.0170881264 : f32
    %22 = vector.broadcast %cst_7 : f32 to vector<1x128xf32>
    %23 = arith.addf %21, %22 : vector<1x128xf32>
    %24 = arith.mulf %23, %16 : vector<1x128xf32>
    %cst_8 = arith.constant 0.0308918804 : f32
    %25 = vector.broadcast %cst_8 : f32 to vector<1x128xf32>
    %26 = arith.addf %24, %25 : vector<1x128xf32>
    %27 = arith.mulf %26, %16 : vector<1x128xf32>
    %cst_9 = arith.constant -0.0501743034 : f32
    %28 = vector.broadcast %cst_9 : f32 to vector<1x128xf32>
    %29 = arith.addf %27, %28 : vector<1x128xf32>
    %30 = arith.mulf %29, %16 : vector<1x128xf32>
    %cst_10 = arith.constant 0.0889789909 : f32
    %31 = vector.broadcast %cst_10 : f32 to vector<1x128xf32>
    %32 = arith.addf %30, %31 : vector<1x128xf32>
    %33 = arith.mulf %32, %16 : vector<1x128xf32>
    %cst_11 = arith.constant -0.214598805 : f32
    %34 = vector.broadcast %cst_11 : f32 to vector<1x128xf32>
    %35 = arith.addf %33, %34 : vector<1x128xf32>
    %36 = arith.mulf %35, %16 : vector<1x128xf32>
    %cst_12 = arith.constant 1.57079625 : f32
    %37 = vector.broadcast %cst_12 : f32 to vector<1x128xf32>
    %38 = arith.addf %36, %37 : vector<1x128xf32>
    %cst_13 = arith.constant 1.000000e+00 : f32
    %39 = vector.broadcast %cst_13 : f32 to vector<1x128xf32>
    %40 = arith.subf %39, %16 : vector<1x128xf32>
    %cst_14 = arith.constant 0.000000e+00 : f32
    %41 = vector.broadcast %cst_14 : f32 to vector<1x128xf32>
    %42 = arith.maximumf %40, %41 : vector<1x128xf32>
    %43 = math.sqrt %42 : vector<1x128xf32>
    %44 = arith.mulf %43, %38 : vector<1x128xf32>
    %cst_15 = arith.constant 0.000000e+00 : f32
    %45 = vector.broadcast %cst_15 : f32 to vector<1x128xf32>
    %46 = arith.cmpf olt, %15, %45 : vector<1x128xf32>
    %cst_16 = arith.constant 3.14159274 : f32
    %47 = vector.broadcast %cst_16 : f32 to vector<1x128xf32>
    %48 = arith.subf %47, %44 : vector<1x128xf32>
    %49 = arith.select %46, %48, %44 : vector<1x128xi1>, vector<1x128xf32>
    %cst_17 = arith.constant 1.000000e-16 : f32
    %50 = vector.broadcast %cst_17 : f32 to vector<1x128xf32>
    %51 = arith.maximumf %11, %50 : vector<1x128xf32>
    %52 = math.rsqrt %51 : vector<1x128xf32>
    %53 = arith.mulf %49, %52 : vector<1x128xf32>
    %54 = tpu.iota {dimensions = array<i32: 0>} : vector<8x1xi32>
    %c3_i32 = arith.constant 3 : i32
    %55 = vector.broadcast %c3_i32 : i32 to vector<8x1xi32>
    %56 = arith.cmpi slt, %54, %55 : vector<8x1xi32>
    %cst_18 = arith.constant 1.000000e+00 : f32
    %57 = vector.broadcast %cst_18 : f32 to vector<1x128xf32>
    %c6_i32 = arith.constant 6 : i32
    %58 = vector.broadcast %c6_i32 : i32 to vector<8x1xi32>
    %59 = arith.cmpi slt, %54, %58 : vector<8x1xi32>
    %cst_19 = arith.constant 0.000000e+00 : f32
    %60 = vector.broadcast %cst_19 : f32 to vector<1x128xf32>
    %61 = vector.shape_cast %59 : vector<8x1xi1> to vector<8x1xi1>
    %62 = vector.broadcast %61 : vector<8x1xi1> to vector<8x128xi1>
    %63 = vector.shape_cast %53 : vector<1x128xf32> to vector<1x128xf32>
    %64 = vector.broadcast %63 : vector<1x128xf32> to vector<8x128xf32>
    %65 = vector.shape_cast %60 : vector<1x128xf32> to vector<1x128xf32>
    %66 = vector.broadcast %65 : vector<1x128xf32> to vector<8x128xf32>
    %67 = arith.select %62, %64, %66 : vector<8x128xi1>, vector<8x128xf32>
    %68 = vector.shape_cast %56 : vector<8x1xi1> to vector<8x1xi1>
    %69 = vector.broadcast %68 : vector<8x1xi1> to vector<8x128xi1>
    %70 = vector.shape_cast %57 : vector<1x128xf32> to vector<1x128xf32>
    %71 = vector.broadcast %70 : vector<1x128xf32> to vector<8x128xf32>
    %72 = arith.select %69, %71, %67 : vector<8x128xi1>, vector<8x128xf32>
    %c0_20 = arith.constant 0 : index
    %c0_21 = arith.constant 0 : index
    %73 = vector.load %arg1[%c0_20, %c0_21] : memref<8x128xf32, #tpu.memory_space<vmem>>, vector<8x128xf32>
    %c0_22 = arith.constant 0 : index
    %c0_23 = arith.constant 0 : index
    %74 = vector.load %arg2[%c0_22, %c0_23] : memref<8x128xf32, #tpu.memory_space<vmem>>, vector<8x128xf32>
    %75 = arith.mulf %74, %72 : vector<8x128xf32>
    %76 = arith.subf %73, %75 : vector<8x128xf32>
    %77 = math.absf %76 : vector<8x128xf32>
    %c0_24 = arith.constant 0 : index
    %c0_25 = arith.constant 0 : index
    %78 = vector.load %arg5[%c0_24, %c0_25] : memref<8x1xf32, #tpu.memory_space<vmem>>, vector<8x1xf32>
    %cst_26 = arith.constant dense<0.000000e+00> : vector<8xf32>
    %79 = vector.multi_reduction <add>, %77, %cst_26 [1] : vector<8x128xf32> to vector<8xf32>
    %80 = vector.shape_cast %79 : vector<8xf32> to vector<8x1xf32>
    %81 = arith.addf %78, %80 : vector<8x1xf32>
    %c0_27 = arith.constant 0 : index
    %c0_28 = arith.constant 0 : index
    %82 = vector.load %arg5[%c0_27, %c0_28] : memref<8x1xf32, #tpu.memory_space<vmem>>, vector<8x1xf32>
    tpu.vector_store %arg5[%c0_27, %c0_28], %81 {strides = array<i32>} : memref<8x1xf32, #tpu.memory_space<vmem>>, vector<8x1xf32>,
    %c0_i32_29 = arith.constant 0 : i32
    %83 = arith.cmpi eq, %arg0, %c0_i32_29 : i32
    %84 = arith.extui %83 : i1 to i32
    %c0_i32_30 = arith.constant 0 : i32
    %85 = arith.cmpi ne, %84, %c0_i32_30 : i32
    scf.if %85 {
      %c0_31 = arith.constant 0 : index
      %86 = memref.load %arg3[%c0_31] : memref<3xf32, #tpu.memory_space<smem>>
      %87 = vector.broadcast %86 : f32 to vector<1x1xf32>
      %c1 = arith.constant 1 : index
      %88 = memref.load %arg3[%c1] : memref<3xf32, #tpu.memory_space<smem>>
      %89 = vector.broadcast %88 : f32 to vector<1x1xf32>
      %c2 = arith.constant 2 : index
      %90 = memref.load %arg3[%c2] : memref<3xf32, #tpu.memory_space<smem>>
      %91 = vector.broadcast %90 : f32 to vector<1x1xf32>
      %cst_32 = arith.constant 0.000000e+00 : f32
      %92 = vector.broadcast %cst_32 : f32 to vector<1x1xf32>
      %93 = arith.subf %92, %87 : vector<1x1xf32>
      %94 = math.exp %93 : vector<1x1xf32>
      %95 = arith.mulf %91, %94 : vector<1x1xf32>
      %cst_33 = arith.constant 0.000000e+00 : f32
      %96 = vector.broadcast %cst_33 : f32 to vector<1x1xf32>
      %97 = arith.subf %96, %89 : vector<1x1xf32>
      %98 = math.exp %97 : vector<1x1xf32>
      %99 = arith.mulf %91, %98 : vector<1x1xf32>
      %c3_i32_34 = arith.constant 3 : i32
      %100 = vector.broadcast %c3_i32_34 : i32 to vector<8x1xi32>
      %101 = arith.cmpi slt, %54, %100 : vector<8x1xi32>
      %c6_i32_35 = arith.constant 6 : i32
      %102 = vector.broadcast %c6_i32_35 : i32 to vector<8x1xi32>
      %103 = arith.cmpi slt, %54, %102 : vector<8x1xi32>
      %cst_36 = arith.constant 0.000000e+00 : f32
      %104 = vector.broadcast %cst_36 : f32 to vector<1x1xf32>
      %105 = vector.shape_cast %99 : vector<1x1xf32> to vector<1x1xf32>
      %106 = vector.broadcast %105 : vector<1x1xf32> to vector<8x1xf32>
      %107 = vector.shape_cast %104 : vector<1x1xf32> to vector<1x1xf32>
      %108 = vector.broadcast %107 : vector<1x1xf32> to vector<8x1xf32>
      %109 = arith.select %103, %106, %108 : vector<8x1xi1>, vector<8x1xf32>
      %110 = vector.shape_cast %95 : vector<1x1xf32> to vector<1x1xf32>
      %111 = vector.broadcast %110 : vector<1x1xf32> to vector<8x1xf32>
      %112 = arith.select %101, %111, %109 : vector<8x1xi1>, vector<8x1xf32>
      %c0_37 = arith.constant 0 : index
      %c0_38 = arith.constant 0 : index
      %113 = vector.load %arg5[%c0_37, %c0_38] : memref<8x1xf32, #tpu.memory_space<vmem>>, vector<8x1xf32>
      %114 = arith.mulf %113, %112 : vector<8x1xf32>
      %cst_39 = arith.constant dense<0.000000e+00> : vector<1xf32>
      %115 = vector.multi_reduction <add>, %114, %cst_39 [0] : vector<8x1xf32> to vector<1xf32>
      %116 = vector.shape_cast %115 : vector<1xf32> to vector<1x1xf32>
      %117 = arith.addf %116, %87 : vector<1x1xf32>
      %118 = arith.addf %117, %89 : vector<1x1xf32>
      %c0_40 = arith.constant 0 : index
      %c0_41 = arith.constant 0 : index
      %119 = vector.load %arg4[%c0_40, %c0_41] : memref<1x1xf32, #tpu.memory_space<vmem>>, vector<1x1xf32>
      tpu.vector_store %arg4[%c0_40, %c0_41], %118 {strides = array<i32>} : memref<1x1xf32, #tpu.memory_space<vmem>>, vector<1x1xf32>,
    } else {
    }
    return
  }
  func.func @transform_0(%arg0: i32) -> (i32, i32) {
    %c0_i32 = arith.constant 0 : i32
    %c0_i32_0 = arith.constant 0 : i32
    return %c0_i32, %arg0 : i32, i32
  }
  func.func @transform_1(%arg0: i32) -> (i32, i32) {
    %c0_i32 = arith.constant 0 : i32
    %c0_i32_0 = arith.constant 0 : i32
    return %c0_i32, %arg0 : i32, i32
  }
  func.func @transform_2(%arg0: i32) -> i32 {
    %c0_i32 = arith.constant 0 : i32
    %c0_i32_0 = arith.constant 0 : i32
    return %c0_i32 : i32
  }
  func.func @transform_3(%arg0: i32) -> (i32, i32) {
    %c0_i32 = arith.constant 0 : i32
    %c0_i32_0 = arith.constant 0 : i32
    %c0_i32_1 = arith.constant 0 : i32
    return %c0_i32, %c0_i32_0 : i32, i32
  }
}

</mosaic_0001>

<llo_original>
// kernel: tpu_custom_call.1
$region0: #{tpu_custom_call.1}
  #allocation0 [shape = 'u32[]', space=smem, size = 0x4, offset = 0x4, fixed_abs, tag = 'smem constant byte address 0x4 - core index']
  #allocation1 [shape = 'u32[144,128]{1,0:T(1,128)}', space=vmem, size = 0x12000, scoped, tag = 'internal scratch']
  #allocation2 [shape = 'f32[8,1]{1,0:T(8,128)}', space=vmem, size = 0x1000, scoped, tag = 'scratch operand']
  %s0 = inlined_call_operand.hbm [shape: f32[8,128], index: 0, kind: input, shape index: {}]
  %s1 = inlined_call_operand.hbm [shape: f32[8,128], index: 1, kind: input, shape index: {}]
  %s2 = inlined_call_operand.vmem [shape: f32[3], index: 2, kind: input, shape index: {}]
  %s3 = inlined_call_operand.hbm [shape: f32[1,1], index: 3, kind: output, shape index: {}]
  %s4 = sld [smem:[#allocation0]]
  $region42: #{tpu_custom_call.1} parent=0
    _
  %s6 = ssub.s32 1, %s4
  %s7 = scalar_select 0, %s6, %s4
  $region1: #{tpu_custom_call.1} parent=0
    #allocation3 [shape = 'u8[4096]{0}', space=vmem, size = 0x1000, scoped, tag = 'input window, operand 0, single buffered']
    #allocation4 [shape = 's32[1]{0}', space=sflag, size = 0x4, scoped, tag = 'scoped memory for tpu_custom_call.1']
    #allocation5 [shape = 's32[1]{0}', space=sflag, size = 0x4, scoped, tag = 'scoped memory for tpu_custom_call.1']
    #allocation6 [shape = 's32[1]{0}', space=sflag, size = 0x4, scoped, tag = 'scoped memory for tpu_custom_call.1']
    #allocation7 [shape = 'u8[4096]{0}', space=vmem, size = 0x1000, scoped, tag = 'input window, operand 1, single buffered']
    #allocation8 [shape = 's32[1]{0}', space=sflag, size = 0x4, scoped, tag = 'scoped memory for tpu_custom_call.1']
    #allocation9 [shape = 'u8[512]{0}', space=smem, size = 0x200, scoped, tag = 'input window, operand 2, single buffered']
    #allocation10 [shape = 'u8[512]{0}', space=vmem, size = 0x400, scoped, tag = 'output window, operand 0, single buffered']
    %8 = vsyncpa [#allocation4], 0
    %9 = vsyncpa [#allocation8], 0
    %10 = vsyncpa [#allocation6], 0
    %11 = vsyncpa [#allocation5], 0
    // Predicated region
    $region2: #{tpu_custom_call.1} parent=1 // pred_check
      _
    $region3: #{tpu_custom_call.1} parent=1 // pred_check_branch
      %13 = sbr.rel (0) target = $region5
    $region4: #{tpu_custom_call.1} parent=1 // pred_region
      %s15 = ssub.s32 128, 128
      %16 = vsyncadd [#allocation4], %s15
      %s18 = sshll.u32 [#allocation3], 4
      %s19 = int_to_ptr.vmem [resolvable:$true] %s18
      %21 = dma.hbm_to_vmem [thread:$0]  %s0, 128, %s19, [#allocation4]
    $region5: #{tpu_custom_call.1} parent=1 // pred_fallthru
      _
    // Predicated region
    $region6: #{tpu_custom_call.1} parent=1 // pred_check
      _
    $region7: #{tpu_custom_call.1} parent=1 // pred_check_branch
      %23 = sbr.rel (0) target = $region9
    $region8: #{tpu_custom_call.1} parent=1 // pred_region
      %s25 = ssub.s32 128, 128
      %26 = vsyncadd [#allocation8], %s25
      %s28 = sshll.u32 [#allocation7], 4
      %s29 = int_to_ptr.vmem [resolvable:$true] %s28
      %31 = dma.hbm_to_vmem [thread:$0]  %s1, 128, %s29, [#allocation8]
    $region9: #{tpu_custom_call.1} parent=1 // pred_fallthru
      _
    // Predicated region
    $region10: #{tpu_custom_call.1} parent=1 // pred_check
      _
    $region11: #{tpu_custom_call.1} parent=1 // pred_check_branch
      %33 = sbr.rel (0) target = $region13
    $region12: #{tpu_custom_call.1} parent=1 // pred_region
      %s35 = ssub.s32 16, 16
      %36 = vsyncadd [#allocation6], %s35
      %s38 = sshll.u32 %s2, 4
      %s39 = int_to_ptr.vmem [resolvable:$true] %s38
      %41 = dma.vmem_to_smem %s39, 16, [#allocation9], [#allocation6]
    $region13: #{tpu_custom_call.1} parent=1 // pred_fallthru
      _
    // Predicated region
    $region14: #{tpu_custom_call.1} parent=1 // pred_check
      _
    $region15: #{tpu_custom_call.1} parent=1 // pred_check_branch
      %43 = sbr.rel (0) target = $region17
    $region16: #{tpu_custom_call.1} parent=1 // pred_region
      %44 = dma.done [#allocation4], 128
    $region17: #{tpu_custom_call.1} parent=1 // pred_fallthru
      _
    // Predicated region
    $region18: #{tpu_custom_call.1} parent=1 // pred_check
      _
    $region19: #{tpu_custom_call.1} parent=1 // pred_check_branch
      %46 = sbr.rel (0) target = $region21
    $region20: #{tpu_custom_call.1} parent=1 // pred_region
      %47 = dma.done [#allocation8], 128
    $region21: #{tpu_custom_call.1} parent=1 // pred_fallthru
      _
    // Predicated region
    $region22: #{tpu_custom_call.1} parent=1 // pred_check
      _
    $region23: #{tpu_custom_call.1} parent=1 // pred_check_branch
      %49 = sbr.rel (0) target = $region25
    $region24: #{tpu_custom_call.1} parent=1 // pred_region
      %50 = dma.done [#allocation6], 16
    $region25: #{tpu_custom_call.1} parent=1 // pred_fallthru
      _
    %51 = sfence
    %p52 = scmp.eq.s32.totalorder 0, 0
    // Predicated region
    $region26: #{tpu_custom_call.1} parent=1 // pred_check
      %p53 = pneg %p52
    $region27: #{tpu_custom_call.1} parent=1 // pred_check_branch
      %55 = sbr.rel (%p53) target = $region29
    $region28: #{tpu_custom_call.1} parent=1 // pred_region
      %vm56 = vcmask 7168
      %57 = vst.msk [vmem:[#allocation2] sm:$0xff] %vm56, 0.0
    $region29: #{tpu_custom_call.1} parent=1 // pred_fallthru
      _
    %v58 = vld [vmem:[#allocation7 + $0x3] sm:$0x1]
    %v59 = vld [vmem:[#allocation7 + $0x4] sm:$0x1]
    %v60 = vld [vmem:[#allocation7 + $0x5] sm:$0x1]
    %v61 = vld [vmem:[#allocation7 + $0x6] sm:$0x1]
    %v62 = vmul.f32 %v58, %v58
    %v63 = vmul.f32 %v59, %v59
    %v64 = vadd.f32 %v62, %v63
    %v65 = vmul.f32 %v60, %v60
    %v66 = vadd.f32 %v64, %v65
    %v67 = vmax.f32 %v61, -1.0
    %v68 = vmin.f32 %v67, 1.0
    %v69 = vand.u32 2147483647, %v68
    %v70 = vmul.f32 %v69, -0.0012624911
    %v71 = vadd.f32 %v70, 0.00667009
    %v72 = vmul.f32 %v71, %v69
    %v73 = vadd.f32 %v72, -0.017088126
    %v74 = vmul.f32 %v73, %v69
    %v75 = vadd.f32 %v74, 0.03089188
    %v76 = vmul.f32 %v75, %v69
    %v77 = vadd.f32 %v76, -0.050174303
    %v78 = vmul.f32 %v77, %v69
    %v79 = vadd.f32 %v78, 0.08897899
    %v80 = vmul.f32 %v79, %v69
    %v81 = vadd.f32 %v80, -0.2145988
    %v82 = vmul.f32 %v81, %v69
    %v83 = vadd.f32 %v82, 1.5707963
    %v84 = vsub.f32 1.0, %v69
    %v85 = vmax.f32 %v84, 0.0
    %v86 = vrsqrt.pop %v85
    %v87 = vmul.f32 %v85, %v86
    %vm88 = vcmp.eq.f32.partialorder %v85, inf
    %v89 = vsel %vm88, %v85, %v87
    %vm90 = vcmp.eq.f32.partialorder %v85, 0.0
    %v91 = vand.u32 %v85, 2147483648
    %v92 = vsel %vm90, %v91, %v89
    %v93 = vmul.f32 %v92, %v83
    %vm94 = vcmp.lt.f32.partialorder %v68, 0.0
    %v95 = vsub.f32 3.1415927, %v93
    %v96 = vsel %vm94, %v95, %v93
    %v97 = vmax.f32 %v66, 1e-16
    %v98 = vrsqrt.pop %v97
    %v99 = vmul.f32 %v96, %v98
    %v100 = vlaneseq
    %v101 = vshrl.u32 %v100, 7
    %vm102 = vcmp.lt.s32.totalorder %v101, 3
    %vm103 = vcmp.lt.s32.totalorder %v101, 6
    %v104 = vsel %vm103, 1, 0
    %vm105 = vcmp.eq.s32.totalorder %v104, 1
    %v106 = vlaneseq
    %v107 = vshrl.u32 %v106, 7
    %v108 = vsub.s32 0, %v107
    %v109 = vrot.slane %v99, %v108
    %v110 = vsel %vm105, %v109, 0.0
    %v111 = vsel %vm102, 1, 0
    %vm112 = vcmp.eq.s32.totalorder %v111, 1
    %v113 = vsel %vm112, 1.0, %v110
    %v114 = vld [vmem:[#allocation3] sm:$0xff]
    %v115 = vld [vmem:[#allocation7] sm:$0xff]
    %v116 = vmul.f32 %v115, %v113
    %v117 = vsub.f32 %v114, %v116
    %v118 = vand.u32 2147483647, %v117
    %v119 = vld [vmem:[#allocation2] sm:$0xff]
    %120 = vadd.xlane.f32.xlu0 %v118
    %v121 = vpop.xlane.xlu0 %120
    %v122 = vadd.f32 %v119, %v121
    %vm123 = vcmask 7168
    %124 = vst.msk [vmem:[#allocation2] sm:$0xff] %vm123, %v122
    // Predicated region
    $region30: #{tpu_custom_call.1} parent=1 // pred_check
      %p125 = pneg %p52
    $region31: #{tpu_custom_call.1} parent=1 // pred_check_branch
      %127 = sbr.rel (%p125) target = $region33
    $region32: #{tpu_custom_call.1} parent=1 // pred_region
      %s128 = sld [smem:[#allocation9]]
      %v129 = vstv %s128
      %s130 = sld [smem:[#allocation9 + $0x1]]
      %v131 = vstv %s130
      %s132 = sld [smem:[#allocation9 + $0x2]]
      %v133 = vstv %s132
      %v134 = vsub.f32 0.0, %v129
      %v135 = vmul.f32 %v134, 1.442695
      %v136 = vpow.pop %v135
      %v137 = vmul.f32 %v133, %v136
      %v138 = vsub.f32 0.0, %v131
      %v139 = vmul.f32 %v138, 1.442695
      %v140 = vpow.pop %v139
      %v141 = vmul.f32 %v133, %v140
      %v142 = vsel %vm103, %v141, 0.0
      %v143 = vsel %vm102, %v137, %v142
      %v144 = vld [vmem:[#allocation2] sm:$0xff]
      %v145 = vmul.f32 %v144, %v143
      %v146 = vsel %vm123, %v145, 0.0
      %v147 = vrot.slane %v146, 4
      %v148 = vadd.f32 %v146, %v147
      %v149 = vrot.slane %v148, 2
      %v150 = vadd.f32 %v148, %v149
      %v151 = vrot.slane %v150, 1
      %v152 = vadd.f32 %v150, %v151
      %v153 = vadd.f32 %v152, %v129
      %v154 = vadd.f32 %v153, %v131
      %vm155 = vcmask 0
      %156 = vst.msk [vmem:[#allocation10] sm:$0x1] %vm155, %v154
    $region33: #{tpu_custom_call.1} parent=1 // pred_fallthru
      _
    // Predicated region
    $region34: #{tpu_custom_call.1} parent=1 // pred_check
      _
    $region35: #{tpu_custom_call.1} parent=1 // pred_check_branch
      %158 = sbr.rel (0) target = $region37
    $region36: #{tpu_custom_call.1} parent=1 // pred_region
      %s160 = ssub.s32 16, 16
      %161 = vsyncadd [#allocation5], %s160
      %s163 = sshll.u32 [#allocation10], 4
      %s164 = int_to_ptr.vmem [resolvable:$true] %s163
      %166 = dma.vmem_to_hbm [thread:$0]  %s164, 16, %s3, [#allocation5]
    $region37: #{tpu_custom_call.1} parent=1 // pred_fallthru
      _
    // Predicated region
    $region38: #{tpu_custom_call.1} parent=1 // pred_check
      _
    $region39: #{tpu_custom_call.1} parent=1 // pred_check_branch
      %168 = sbr.rel (0) target = $region41
    $region40: #{tpu_custom_call.1} parent=1 // pred_region
      %169 = dma.done [#allocation5], 16
    $region41: #{tpu_custom_call.1} parent=1 // pred_fallthru
      _
    %170 = vsyncpa [#allocation4], 1
    %171 = vsyncpa [#allocation8], 1
    %172 = vsyncpa [#allocation5], 1
    %173 = vsyncpa [#allocation6], 1

</llo_original>
